<compile_context>
chip_gen: v5e
topology: v5e:2x2
jax: 0.10.0
libtpu: 0.0.40
codegen_flags: <defaults>
</compile_context>

<pallas_src>
import jax
import jax.numpy as jnp
from jax.experimental import pallas as pl
from jax.experimental.pallas import tpu as pltpu


# ----------------------------------------------------------------------------
# Parallel GEMM + bias kernel (used for the hoisted input / output projections)
# ----------------------------------------------------------------------------
def _proj_kernel(x_ref, w_ref, b_ref, o_ref):
    o_ref[...] = (
        jnp.dot(x_ref[...], w_ref[...], preferred_element_type=jnp.float32)
        + b_ref[...]
    ).astype(o_ref.dtype)


def _row_tile(m, cap=512):
    """Largest row tile <= cap that evenly divides m (m itself if small)."""
    if m <= cap:
        return m
    best = 1
    for t in range(1, cap + 1):
        if m % t == 0:
            best = t
    return best


def _proj(x2d, w, b):
    """y = x2d @ w + b as a row-parallel Pallas GEMM. x2d: (M, K), w: (K, N)."""
    M, K = x2d.shape
    N = w.shape[1]
    tm = _row_tile(M)
    grid = (M // tm,)
    return pl.pallas_call(
        _proj_kernel,
        out_shape=jax.ShapeDtypeStruct((M, N), jnp.float32),
        grid_spec=pltpu.PrefetchScalarGridSpec(
            num_scalar_prefetch=0,
            grid=grid,
            in_specs=[
                pl.BlockSpec((tm, K), lambda i: (i, 0)),
                pl.BlockSpec((K, N), lambda i: (0, 0)),
                pl.BlockSpec((1, N), lambda i: (0, 0)),
            ],
            out_specs=pl.BlockSpec((tm, N), lambda i: (i, 0)),
        ),
        compiler_params=pltpu.CompilerParams(
            dimension_semantics=("parallel",)),
    )(x2d, w, b)


def _pad_cols(a, mult):
    """Zero-pad the last dim of `a` up to a multiple of `mult`."""
    n = a.shape[-1]
    pad = (-n) % mult
    if pad:
        a = jnp.pad(a, [(0, 0)] * (a.ndim - 1) + [(0, pad)])
    return a, n


# ----------------------------------------------------------------------------
# Sequential 2-layer LSTM recurrence (time loop internalized in the kernel)
# ----------------------------------------------------------------------------
def _lstm_recurrence_kernel(gx0_ref, whh0_ref, wih1_ref, whh1_ref, b1_ref,
                            h1_out_ref, h0_s, c0_s, h1_s, c1_s):
    """One grid step == one chunk of T timesteps.

    gx0_ref holds the precomputed layer-0 gate inputs (x_t @ w_ih0 + b0), so
    the per-step serial work is only the recurrent matmuls. PyTorch LSTM gate
    order: i, f, g, o. Scratch h0/c0/h1/c1 carry state across chunks; within
    a chunk the state is loop-carried (stays in vregs).
    """
    chunk = pl.program_id(0)
    T = gx0_ref.shape[0]

    @pl.when(chunk == 0)
    def _init():
        h0_s[...] = jnp.zeros_like(h0_s)
        c0_s[...] = jnp.zeros_like(c0_s)
        h1_s[...] = jnp.zeros_like(h1_s)
        c1_s[...] = jnp.zeros_like(c1_s)

    # Load weights once per chunk; they stay resident across all T steps.
    whh0 = whh0_ref[...]
    wih1 = wih1_ref[...]
    whh1 = whh1_ref[...]
    b1 = b1_ref[...]

    def gate_math(gates, c):
        # Gate slices are sub-lane-tile at H=32; fine here, pad/align H for
        # production hidden sizes.
        i, f, g, o = jnp.split(gates, 4, axis=-1)
        c_new = jax.nn.sigmoid(f) * c + jax.nn.sigmoid(i) * jnp.tanh(g)
        h_new = jax.nn.sigmoid(o) * jnp.tanh(c_new)
        return h_new, c_new

    def step(tt, carry):
        h0, c0, h1, c1 = carry
        # Layer 0: input projection precomputed -> only the recurrent matmul.
        gates0 = gx0_ref[tt] + jnp.dot(h0, whh0,
                                       preferred_element_type=jnp.float32)
        h0, c0 = gate_math(gates0, c0)
        # Layer 1: two small dots (a [h0, h1] @ [w_ih1; w_hh1] fusion would
        # save one MXU push per step but needs an unaligned lane concat).
        gates1 = (jnp.dot(h0, wih1, preferred_element_type=jnp.float32)
                  + jnp.dot(h1, whh1, preferred_element_type=jnp.float32)
                  + b1)
        h1, c1 = gate_math(gates1, c1)
        # Emit only the (lane-denser) hidden state; the big V-projection runs
        # in a separate parallel kernel outside the serial loop.
        h1_out_ref[tt] = h1.astype(h1_out_ref.dtype)
        return h0, c0, h1, c1

    carry0 = (h0_s[...], c0_s[...], h1_s[...], c1_s[...])
    unroll = True if T <= 32 else 8
    h0, c0, h1, c1 = jax.lax.fori_loop(0, T, step, carry0, unroll=unroll)

    # Persist state for the next time-chunk (no-op cost when grid == (1,)).
    h0_s[...] = h0
    c0_s[...] = c0
    h1_s[...] = h1
    c1_s[...] = c1


def _lstm_recurrence(gx0, w_hh0, w_ih1, w_hh1, b1, *, time_chunk=None):
    S, B, G = gx0.shape
    H = G // 4
    T = S if time_chunk is None else time_chunk
    assert S % T == 0, "time_chunk must divide the sequence length"
    grid = (S // T,)
    return pl.pallas_call(
        _lstm_recurrence_kernel,
        out_shape=jax.ShapeDtypeStruct((S, B, H), jnp.float32),
        grid_spec=pltpu.PrefetchScalarGridSpec(
            num_scalar_prefetch=0,
            grid=grid,
            in_specs=[
                pl.BlockSpec((T, B, G), lambda c: (c, 0, 0)),   # precomputed gates
                pl.BlockSpec((H, G), lambda c: (0, 0)),         # w_hh0
                pl.BlockSpec((H, G), lambda c: (0, 0)),         # w_ih1
                pl.BlockSpec((H, G), lambda c: (0, 0)),         # w_hh1
                pl.BlockSpec((1, G), lambda c: (0, 0)),         # b1
            ],
            out_specs=pl.BlockSpec((T, B, H), lambda c: (c, 0, 0)),
            scratch_shapes=[                                     # explicit entries
                pltpu.VMEM((B, H), jnp.float32),                 # h0
                pltpu.VMEM((B, H), jnp.float32),                 # c0
                pltpu.VMEM((B, H), jnp.float32),                 # h1
                pltpu.VMEM((B, H), jnp.float32),                 # c1
            ],
        ),
        # The time axis is a recurrence -> must run sequentially.
        compiler_params=pltpu.CompilerParams(
            dimension_semantics=("arbitrary",)),
    )(gx0, w_hh0, w_ih1, w_hh1, b1)


# ----------------------------------------------------------------------------
# Forward pass (== TextGenerationModel.forward on already-embedded input)
# ----------------------------------------------------------------------------
def text_generation_forward(x, params, *, time_chunk=None):
    """x: (S, B, H) float32 -> logits (S, B, V) float32."""
    S, B, H = x.shape
    V = params["w_out"].shape[1]
    G = 4 * H

    # (1) Hoisted, parallel layer-0 input projection over all S*B rows.
    gx0 = _proj(x.reshape(S * B, H), params["w_ih0"], params["b0"])
    gx0 = gx0.reshape(S, B, G)

    # (2) Sequential recurrence emitting only the layer-1 hidden sequence.
    h1_seq = _lstm_recurrence(gx0, params["w_hh0"],
                              params["w_ih1"], params["w_hh1"], params["b1"],
                              time_chunk=time_chunk)             # (S, B, H)

    # (3) Hoisted, parallel output projection; pad V to a multiple of 128 so
    #     the kernel's output stores are lane-dense, then slice the pad off.
    w_out_p, _ = _pad_cols(params["w_out"], 128)
    b_out_p, _ = _pad_cols(params["b_out"], 128)
    logits_p = _proj(h1_seq.reshape(S * B, H), w_out_p, b_out_p)  # (S*B, Vp)
    return logits_p[:, :V].reshape(S, B, V)


# ----------------------------------------------------------------------------
# Parameters & pure-JAX reference
# ----------------------------------------------------------------------------
def init_params(key, hidden, vocab):
    """Deterministic init mimicking PyTorch's U(-1/sqrt(H), 1/sqrt(H)).

    Weights stored pre-transposed for y = x @ W; the two LSTM biases
    (b_ih + b_hh) are pre-summed per layer. Kept in float32 for bit-close
    agreement with the reference (cast to bfloat16 on v6e/v7x if desired).
    """
    k = 1.0 / jnp.sqrt(hidden)
    keys = jax.random.split(key, 10)

    def u(kk, shape):
        return jax.random.uniform(kk, shape, jnp.float32, -k, k)

    return {
        "w_ih0": u(keys[0], (hidden, 4 * hidden)),
        "w_hh0": u(keys[1], (hidden, 4 * hidden)),
        "b0":    u(keys[2], (1, 4 * hidden)) + u(keys[3], (1, 4 * hidden)),
        "w_ih1": u(keys[4], (hidden, 4 * hidden)),
        "w_hh1": u(keys[5], (hidden, 4 * hidden)),
        "b1":    u(keys[6], (1, 4 * hidden)) + u(keys[7], (1, 4 * hidden)),
        "w_out": u(keys[8], (hidden, vocab)),
        "b_out": u(keys[9], (1, vocab)),
    }


def reference_forward(x, params):
    """Pure-JAX reference (lax.scan) replicating nn.LSTM(2 layers) + Linear."""
    S, B, H = x.shape

    def step(x_in, h, c, wih, whh, b):
        gates = x_in @ wih + h @ whh + b
        i, f, g, o = jnp.split(gates, 4, axis=-1)
        c = jax.nn.sigmoid(f) * c + jax.nn.sigmoid(i) * jnp.tanh(g)
        h = jax.nn.sigmoid(o) * jnp.tanh(c)
        return h, c

    def cell(carry, x_t):
        h0, c0, h1, c1 = carry
        h0, c0 = step(x_t, h0, c0, params["w_ih0"], params["w_hh0"], params["b0"])
        h1, c1 = step(h0, h1, c1, params["w_ih1"], params["w_hh1"], params["b1"])
        out = h1 @ params["w_out"] + params["b_out"]
        return (h0, c0, h1, c1), out

    init = tuple(jnp.zeros((B, H), jnp.float32) for _ in range(4))
    _, outs = jax.lax.scan(cell, init, x)
    return outs


if __name__ == "__main__":
    # Small shapes consistent with the module: seq=8, batch=2, hidden=32, vocab=16.
    SEQ, BATCH, HIDDEN, VOCAB = 8, 2, 32, 16

    key = jax.random.PRNGKey(0)
    k_x, k_p = jax.random.split(key)

    # x is the (already embedded) input sequence: (seq, batch, hidden).
    x = jax.random.normal(k_x, (SEQ, BATCH, HIDDEN), jnp.float32)
    params = init_params(k_p, HIDDEN, VOCAB)

    out = text_generation_forward(x, params)
    out = jax.block_until_ready(out)

    ref = jax.block_until_ready(reference_forward(x, params))
    assert out.shape == (SEQ, BATCH, VOCAB)
    assert jnp.allclose(out, ref, atol=1e-3, rtol=1e-3), (
        float(jnp.max(jnp.abs(out - ref))))

    print("KERNEL_OK")
</pallas_src>

<mosaic_0001>
module attributes {stable_mosaic.version = 11 : i64} {
  func.func @_proj_kernel(%arg0: i32, %arg1: memref<16x32xf32, #tpu.memory_space<vmem>>, %arg2: memref<32x128xf32, #tpu.memory_space<vmem>>, %arg3: memref<1x128xf32, #tpu.memory_space<vmem>>, %arg4: memref<16x128xf32, #tpu.memory_space<vmem>>) attributes {dimension_semantics = [#tpu.dimension_semantics<parallel>], iteration_bounds = array<i64: 1>, scalar_prefetch = 0 : i64, scratch_operands = 0 : i64, tpu.core_type = #tpu.core_type<tc>, window_params = [{transform_indices = @transform_0, window_bounds = array<i64: 16, 32>}, {pipeline_mode = #tpu.pipeline_mode<synchronous>, transform_indices = @transform_1, window_bounds = array<i64: 32, 128>}, {pipeline_mode = #tpu.pipeline_mode<synchronous>, transform_indices = @transform_2, window_bounds = array<i64: 1, 128>}, {transform_indices = @transform_3, window_bounds = array<i64: 16, 128>}]} {
    %c0 = arith.constant 0 : index
    %c0_0 = arith.constant 0 : index
    %0 = vector.load %arg1[%c0, %c0_0] : memref<16x32xf32, #tpu.memory_space<vmem>>, vector<16x32xf32>
    %c0_1 = arith.constant 0 : index
    %c0_2 = arith.constant 0 : index
    %1 = vector.load %arg2[%c0_1, %c0_2] : memref<32x128xf32, #tpu.memory_space<vmem>>, vector<32x128xf32>
    %cst = arith.constant dense<0.000000e+00> : vector<16x128xf32>
    %2 = tpu.matmul %0, %1, %cst {dimension_numbers = #tpu.dot_dimension_numbers<[1], [0], [0], [1], [0, 0, 1, 1], [], []>} : vector<16x32xf32>, vector<32x128xf32>, vector<16x128xf32> -> vector<16x128xf32>
    %c0_3 = arith.constant 0 : index
    %c0_4 = arith.constant 0 : index
    %3 = vector.load %arg3[%c0_3, %c0_4] : memref<1x128xf32, #tpu.memory_space<vmem>>, vector<1x128xf32>
    %4 = vector.broadcast %3 : vector<1x128xf32> to vector<16x128xf32>
    %5 = arith.addf %2, %4 : vector<16x128xf32>
    %c0_5 = arith.constant 0 : index
    %c0_6 = arith.constant 0 : index
    %6 = vector.load %arg4[%c0_5, %c0_6] : memref<16x128xf32, #tpu.memory_space<vmem>>, vector<16x128xf32>
    tpu.vector_store %arg4[%c0_5, %c0_6], %5 {strides = array<i32>} : memref<16x128xf32, #tpu.memory_space<vmem>>, vector<16x128xf32>,
    return
  }
  func.func @transform_0(%arg0: i32) -> (i32, i32) {
    %c0_i32 = arith.constant 0 : i32
    %c0_i32_0 = arith.constant 0 : i32
    return %arg0, %c0_i32 : i32, i32
  }
  func.func @transform_1(%arg0: i32) -> (i32, i32) {
    %c0_i32 = arith.constant 0 : i32
    %c0_i32_0 = arith.constant 0 : i32
    %c0_i32_1 = arith.constant 0 : i32
    return %c0_i32, %c0_i32_0 : i32, i32
  }
  func.func @transform_2(%arg0: i32) -> (i32, i32) {
    %c0_i32 = arith.constant 0 : i32
    %c0_i32_0 = arith.constant 0 : i32
    %c0_i32_1 = arith.constant 0 : i32
    return %c0_i32, %c0_i32_0 : i32, i32
  }
  func.func @transform_3(%arg0: i32) -> (i32, i32) {
    %c0_i32 = arith.constant 0 : i32
    %c0_i32_0 = arith.constant 0 : i32
    return %arg0, %c0_i32 : i32, i32
  }
}

</mosaic_0001>

<llo_original>
// kernel: tpu_custom_call.1
$region0: #{tpu_custom_call.1}
  #allocation0 [shape = 'u32[]', space=smem, size = 0x4, offset = 0x4, fixed_abs, tag = 'smem constant byte address 0x4 - core index']
  #allocation1 [shape = 'u32[72,128]{1,0:T(1,128)}', space=vmem, size = 0x9000, scoped, tag = 'internal scratch']
  %s0 = inlined_call_operand.hbm [shape: f32[16,32], index: 0, kind: input, shape index: {}]
  %s1 = inlined_call_operand.hbm [shape: f32[32,128], index: 1, kind: input, shape index: {}]
  %s2 = inlined_call_operand.vmem [shape: f32[1,128], index: 2, kind: input, shape index: {}]
  %s3 = inlined_call_operand.hbm [shape: f32[16,128], index: 3, kind: output, shape index: {}]
  %s4 = sld [smem:[#allocation0]]
  $region30: #{tpu_custom_call.1} parent=0
    _
  %s6 = ssub.s32 1, %s4
  %s7 = scalar_select 0, %s6, %s4
  $region1: #{tpu_custom_call.1} parent=0
    #allocation2 [shape = 'u8[8192]{0}', space=vmem, size = 0x2000, scoped, tag = 'input window, operand 0, single buffered']
    #allocation3 [shape = 's32[1]{0}', space=sflag, size = 0x4, scoped, tag = 'scoped memory for tpu_custom_call.1']
    #allocation4 [shape = 's32[1]{0}', space=sflag, size = 0x4, scoped, tag = 'scoped memory for tpu_custom_call.1']
    #allocation5 [shape = 'u8[16384]{0}', space=vmem, size = 0x4000, scoped, tag = 'input window, operand 1, single buffered']
    #allocation6 [shape = 's32[1]{0}', space=sflag, size = 0x4, scoped, tag = 'scoped memory for tpu_custom_call.1']
    #allocation7 [shape = 'u8[8192]{0}', space=vmem, size = 0x2000, scoped, tag = 'output window, operand 0, single buffered']
    %8 = vsyncpa [#allocation3], 0
    %9 = vsyncpa [#allocation6], 0
    %10 = vsyncpa [#allocation4], 0
    // Predicated region
    $region2: #{tpu_custom_call.1} parent=1 // pred_check
      _
    $region3: #{tpu_custom_call.1} parent=1 // pred_check_branch
      %12 = sbr.rel (0) target = $region5
    $region4: #{tpu_custom_call.1} parent=1 // pred_region
      %14 = vsyncadd [#allocation3], 0
      %s15 = sshll.u32 %s0, 4
      %s16 = int_to_ptr.hbm [resolvable:$true] %s15
      %s17 = sshll.u32 [#allocation2], 4
      %s18 = int_to_ptr.vmem [resolvable:$true] %s17
      %23 = dma.hbm_to_vmem [thread:$0]  %s16, 256, %s18, [#allocation3], 128, 128, 8
    $region5: #{tpu_custom_call.1} parent=1 // pred_fallthru
      _
    // Predicated region
    $region6: #{tpu_custom_call.1} parent=1 // pred_check
      _
    $region7: #{tpu_custom_call.1} parent=1 // pred_check_branch
      %25 = sbr.rel (0) target = $region9
    $region8: #{tpu_custom_call.1} parent=1 // pred_region
      %27 = vsyncadd [#allocation6], 0
      %s28 = sshll.u32 %s1, 4
      %s29 = int_to_ptr.hbm [resolvable:$true] %s28
      %s30 = sshll.u32 [#allocation5], 4
      %s31 = int_to_ptr.vmem [resolvable:$true] %s30
      %36 = dma.hbm_to_vmem [thread:$0]  %s29, 512, %s31, [#allocation6], 128, 128, 8
    $region9: #{tpu_custom_call.1} parent=1 // pred_fallthru
      _
    // Predicated region
    $region10: #{tpu_custom_call.1} parent=1 // pred_check
      _
    $region11: #{tpu_custom_call.1} parent=1 // pred_check_branch
      %38 = sbr.rel (0) target = $region13
    $region12: #{tpu_custom_call.1} parent=1 // pred_region
      _
    $region13: #{tpu_custom_call.1} parent=1 // pred_fallthru
      _
    // Predicated region
    $region14: #{tpu_custom_call.1} parent=1 // pred_check
      _
    $region15: #{tpu_custom_call.1} parent=1 // pred_check_branch
      %40 = sbr.rel (0) target = $region17
    $region16: #{tpu_custom_call.1} parent=1 // pred_region
      %42 = dma.done [#allocation3], 256
    $region17: #{tpu_custom_call.1} parent=1 // pred_fallthru
      _
    // Predicated region
    $region18: #{tpu_custom_call.1} parent=1 // pred_check
      _
    $region19: #{tpu_custom_call.1} parent=1 // pred_check_branch
      %44 = sbr.rel (0) target = $region21
    $region20: #{tpu_custom_call.1} parent=1 // pred_region
      %46 = dma.done [#allocation6], 512
    $region21: #{tpu_custom_call.1} parent=1 // pred_fallthru
      _
    %v47 = vld [vmem:[#allocation2] sm:$0xff]
    %v48 = vld [vmem:[#allocation2 + $0x8] sm:$0xff]
    %v49 = vld [vmem:[#allocation5] sm:$0xff]
    %v50 = vld [vmem:[#allocation5 + $0x8] sm:$0xff]
    %v51 = vld [vmem:[#allocation5 + $0x10] sm:$0xff]
    %v52 = vld [vmem:[#allocation5 + $0x18] sm:$0xff]
    %v53 = vld [vmem:[%s2] sm:$0x1]
    %v55 = vperm.slane %v53, 0
    %vm57 = vcmask 261120
    %v59 = vsel %vm57, %v47, 0
    %v62 = vsel %vm57, %v48, 0
    %64 = vmatpush.msra.mxu0 0.0
    %65 = vmatpush.msra.mxu0 0.0
    %66 = vmatpush.msra.mxu0 0.0
    %67 = vmatpush.msra.mxu0 0.0
    %68 = vmatpush.msra.mxu0 0.0
    %69 = vmatpush.msra.mxu0 0.0
    %70 = vmatpush.msra.mxu0 0.0
    %71 = vmatpush.msra.mxu0 0.0
    %72 = vmatpush.msra.mxu0 0.0
    %73 = vmatpush.msra.mxu0 0.0
    %74 = vmatpush.msra.mxu0 0.0
    %75 = vmatpush.msra.mxu0 0.0
    %76 = vmatpush.msra.mxu0 %v52
    %77 = vmatpush.msra.mxu0 %v51
    %78 = vmatpush.msra.mxu0 %v50
    %79 = vmatpush.msra.mxu0 %v49
    %80 = vmatmul.f32.gmra.mxu0 %v59
    %v81 = vpop.f32.mrf.mxu0
    %v82 = vadd.f32 %v55, %v81
    %83 = vmatmul.f32.gmra.mxu0 %v62
    %v84 = vpop.f32.mrf.mxu0
    %v85 = vadd.f32 %v55, %v84
    %86 = vdwg.mxu0
    %87 = vst [vmem:[#allocation7] sm:$0xff] %v82
    %88 = vst [vmem:[#allocation7 + $0x8] sm:$0xff] %v85
    // Predicated region
    $region22: #{tpu_custom_call.1} parent=1 // pred_check
      _
    $region23: #{tpu_custom_call.1} parent=1 // pred_check_branch
      %90 = sbr.rel (0) target = $region25
    $region24: #{tpu_custom_call.1} parent=1 // pred_region
      %92 = vsyncadd [#allocation4], 0
      %s93 = sshll.u32 [#allocation7], 4
      %s94 = int_to_ptr.vmem [resolvable:$true] %s93
      %s95 = sshll.u32 %s3, 4
      %s96 = int_to_ptr.hbm [resolvable:$true] %s95
      %101 = dma.vmem_to_hbm [thread:$0]  %s94, 256, %s96, [#allocation4], 128, 128, 8
    $region25: #{tpu_custom_call.1} parent=1 // pred_fallthru
      _
    // Predicated region
    $region26: #{tpu_custom_call.1} parent=1 // pred_check
      _
    $region27: #{tpu_custom_call.1} parent=1 // pred_check_branch
      %103 = sbr.rel (0) target = $region29
    $region28: #{tpu_custom_call.1} parent=1 // pred_region
      %105 = dma.done [#allocation4], 256
    $region29: #{tpu_custom_call.1} parent=1 // pred_fallthru
      _
    %106 = vsyncpa [#allocation3], 1
    %107 = vsyncpa [#allocation6], 1
    %108 = vsyncpa [#allocation4], 1

</llo_original>
